<compile_context>
chip_gen: v7x
topology: tpu7x:2x2x1
jax: 0.10.0
libtpu: 0.0.40
codegen_flags: <defaults>
</compile_context>

<pallas_src>
import jax
import jax.numpy as jnp
from jax import lax
from jax.experimental import pallas as pl
from jax.experimental.pallas import tpu as pltpu

_INV_SQRT2 = 0.7071067811865476

_TM_CANDIDATES = (1024, 768, 512, 384, 256, 192, 128, 64, 32, 16, 8)
_TN_CANDIDATES = (2048, 1024, 512, 256, 128)


def _mlp_kernel(x_ref, wu_ref, bu_ref, wd_ref, bd_ref, o_ref, acc_ref):
    """One (row-tile, ffn-chunk) step of out = gelu(x @ Wu + bu) @ Wd + bd."""
    k = pl.program_id(1)

    @pl.when(k == 0)
    def _():
        acc_ref[...] = jnp.zeros_like(acc_ref)

    # Up projection for this ffn chunk; the MXU sees the native input dtype
    # (bf16 weights take the bf16 path), accumulation is f32.
    h = jnp.dot(x_ref[...], wu_ref[...], preferred_element_type=jnp.float32)
    h = h + bu_ref[...].astype(jnp.float32)

    # Exact GELU (approximate='none'): 0.5 * h * (1 + erf(h / sqrt(2)))
    h = 0.5 * h * (1.0 + lax.erf(h * jnp.float32(_INV_SQRT2)))

    # Partial down projection; h is cast to the weight dtype (no-op for f32,
    # deliberate mixed precision for bf16 weights).  Accumulation stays f32.
    acc_ref[...] += jnp.dot(h.astype(wd_ref.dtype), wd_ref[...],
                            preferred_element_type=jnp.float32)

    @pl.when(k == pl.num_programs(1) - 1)
    def _():
        o_ref[...] = (acc_ref[...] +
                      bd_ref[...].astype(jnp.float32)).astype(o_ref.dtype)


def _round_up(x, m):
    return (x + m - 1) // m * m


def _vmem_capacity_bytes():
    """Per-core VMEM capacity (128 MiB v5e/v6e, 64 MiB v7x); conservative
    64-MiB fallback if the query is unavailable."""
    try:
        info = pltpu.get_tpu_info()
        cap = getattr(info, "vmem_capacity_bytes", None)
        if cap:
            return int(cap)
    except Exception:
        pass
    return 64 * (1 << 20)


def _footprint(tile_m, tn, d_model, x_bytes, w_bytes, out_bytes, single_buffer):
    """Per-step VMEM footprint for the chosen tiling.

    Weight / b_up chunks change every k step -> double buffered.  The x tile
    and b_down are constant along k; when `single_buffer` they are requested
    with pl.Buffered(1) and counted once.  The output block stays double
    buffered (writeback overlap across row tiles)."""
    in_bufs = 1 if single_buffer else 2
    x_tile = in_bufs * tile_m * d_model * x_bytes
    bd = in_bufs * d_model * w_bytes
    wu = 2 * d_model * tn * w_bytes
    wd = 2 * tn * d_model * w_bytes
    bu = 2 * tn * w_bytes
    out = 2 * tile_m * d_model * out_bytes
    acc = tile_m * d_model * 4
    h = tile_m * tn * 4
    return x_tile + bd + wu + wd + bu + out + acc + h


def _choose_tiles(M, d_model, ffn_hidden, x_bytes, w_bytes, out_bytes,
                  budget_bytes, single_buffer):
    """Jointly pick (tile_m, tn).

    W_up/W_down are re-streamed from HBM once per row tile, so arithmetic
    intensity scales with tile_m; per-step overhead and accumulator RMW
    traffic scale with 1/(tile_m*tn).  Minimize 1/tile_m + 0.25/tn over
    candidates that fit the VMEM budget (prefers big tile_m, then big tn;
    tn=128 becomes a last resort)."""
    m8 = _round_up(M, 8)
    tm_cands = sorted({min(c, m8) for c in _TM_CANDIDATES}, reverse=True)
    best = None
    for tm in tm_cands:
        for tn in _TN_CANDIDATES:
            if tn > ffn_hidden or ffn_hidden % tn:
                continue
            fp = _footprint(tm, tn, d_model, x_bytes, w_bytes, out_bytes,
                            single_buffer)
            if fp > budget_bytes:
                continue
            score = 1.0 / tm + 0.25 / tn
            if best is None or score < best[0]:
                best = (score, tm, tn)
    if best is not None:
        return best[1], best[2]
    # Degenerate fallback (huge d_model or odd ffn): smallest workable tiles.
    tn = ffn_hidden
    for c in reversed(_TN_CANDIDATES):
        if c <= ffn_hidden and ffn_hidden % c == 0:
            tn = c
            break
    return min(m8, 128), tn


def _fit_tile_m_to_rows(M, tile_m):
    """Snap tile_m to a multiple of 8 that divides M when cheaply possible so
    the jnp.pad copy of the activations is skipped."""
    if M % 8:
        return tile_m               # sublane padding unavoidable anyway
    if M <= tile_m:
        return M                    # single row tile, no padding
    if M % tile_m == 0:
        return tile_m
    tm = (tile_m // 8) * 8
    floor = max(8, tile_m // 2)
    while tm >= floor:
        if M % tm == 0:
            return tm
        tm -= 8
    return tile_m                   # accept a padded last tile


def _forward_with_config(x2d, w_up, b_up2, w_down, b_down2, out_dtype,
                         single_buffer, budget_bytes, limit_cap):
    M, d_model = x2d.shape
    ffn_hidden = w_up.shape[1]
    x_bytes = x2d.dtype.itemsize
    w_bytes = w_up.dtype.itemsize
    out_bytes = jnp.dtype(out_dtype).itemsize

    tile_m, tn = _choose_tiles(M, d_model, ffn_hidden, x_bytes, w_bytes,
                               out_bytes, budget_bytes, single_buffer)
    tile_m = _fit_tile_m_to_rows(M, tile_m)

    m_pad = _round_up(M, tile_m)
    xp = x2d
    if m_pad != M:
        # Only when no divisor-friendly tile_m exists (ragged last row tile).
        xp = jnp.pad(x2d, ((0, m_pad - M), (0, 0)))

    grid = (m_pad // tile_m, ffn_hidden // tn)
    n_row_tiles = grid[0]

    # Weights (and their biases) are re-streamed once per row tile.
    weight_stream_bytes = n_row_tiles * (
        w_up.size * w_up.dtype.itemsize + w_down.size * w_down.dtype.itemsize
        + b_up2.size * b_up2.dtype.itemsize + b_down2.size * b_down2.dtype.itemsize)
    cost = pl.CostEstimate(
        flops=4 * m_pad * d_model * ffn_hidden,          # two matmuls
        transcendentals=m_pad * ffn_hidden,              # erf per hidden element
        bytes_accessed=(xp.size * x_bytes + weight_stream_bytes
                        + m_pad * d_model * out_bytes),
    )

    vmem_need = _footprint(tile_m, tn, d_model, x_bytes, w_bytes, out_bytes,
                           single_buffer)
    vmem_limit = int(min(max(int(1.2 * vmem_need), 32 * (1 << 20)), limit_cap))

    def k_const_spec(block_shape, index_map):
        # Block index is constant along the inner k axis -> single buffer it so
        # the reclaimed VMEM can fund larger tiles.
        if single_buffer:
            return pl.BlockSpec(block_shape, index_map,
                                pipeline_mode=pl.Buffered(1))
        return pl.BlockSpec(block_shape, index_map)

    in_specs = [
        k_const_spec((tile_m, d_model), lambda i, k: (i, 0)),   # x rows
        pl.BlockSpec((d_model, tn), lambda i, k: (0, k)),       # W_up chunk
        pl.BlockSpec((1, tn), lambda i, k: (0, k)),             # b_up chunk
        pl.BlockSpec((tn, d_model), lambda i, k: (k, 0)),       # W_down chunk
        k_const_spec((1, d_model), lambda i, k: (0, 0)),        # b_down
    ]
    out_specs = pl.BlockSpec((tile_m, d_model), lambda i, k: (i, 0))

    out2d = pl.pallas_call(
        _mlp_kernel,
        out_shape=jax.ShapeDtypeStruct((m_pad, d_model), out_dtype),
        grid_spec=pltpu.PrefetchScalarGridSpec(
            num_scalar_prefetch=0,
            grid=grid,
            in_specs=in_specs,
            out_specs=out_specs,
            scratch_shapes=[pltpu.VMEM((tile_m, d_model), jnp.float32)],
        ),
        compiler_params=pltpu.CompilerParams(
            dimension_semantics=("parallel", "arbitrary"),
            vmem_limit_bytes=vmem_limit,
        ),
        cost_estimate=cost,
    )(xp, w_up, b_up2, w_down, b_down2)

    if m_pad != M:
        out2d = out2d[:M]
    return out2d


def mpt_mlp_forward(x, w_up, b_up, w_down, b_down):
    """Pallas MPTMLP forward.

    x       : (..., d_model)
    w_up    : (d_model, ffn_hidden)        (nn.Linear weight, transposed)
    b_up    : (ffn_hidden,)
    w_down  : (ffn_hidden, d_model)
    b_down  : (d_model,)
    """
    *lead, d_model = x.shape
    ffn_hidden = w_up.shape[1]
    M = 1
    for s in lead:
        M *= s

    x2d = x.reshape(M, d_model)
    b_up2 = b_up.reshape(1, ffn_hidden)
    b_down2 = b_down.reshape(1, d_model)

    cap = _vmem_capacity_bytes()
    budget = int(0.75 * cap)        # ~96 MiB on v5e/v6e, ~48 MiB on v7x
    limit_cap = int(0.85 * cap)     # ~109 MiB on v5e/v6e, ~54 MiB on v7x

    # Config fallback chain (only matters if a config fails to lower in this
    # eager call): aggressive single-buffered tiling -> default buffering ->
    # conservative 40-MiB tiling.
    configs = []
    if hasattr(pl, "Buffered"):
        configs.append((True, budget, limit_cap))
    configs.append((False, budget, limit_cap))
    configs.append((False, 40 * (1 << 20), min(56 * (1 << 20), limit_cap)))

    out2d = None
    last_err = None
    for single_buffer, budget_bytes, lim in configs:
        try:
            out2d = _forward_with_config(x2d, w_up, b_up2, w_down, b_down2,
                                         x.dtype, single_buffer, budget_bytes,
                                         lim)
            break
        except Exception as err:    # pragma: no cover - lowering fallback
            last_err = err
    if out2d is None:
        raise last_err

    return out2d.reshape(*lead, d_model)


def _reference(x, w_up, b_up, w_down, b_down):
    h = x @ w_up + b_up
    h = jax.nn.gelu(h, approximate=False)
    return h @ w_down + b_down


if __name__ == "__main__":
    # module config: d_model=32, expansion_ratio=4 -> ffn_hidden_size=128
    batch, seq, d_model = 2, 8, 32
    expansion_ratio = 4
    ffn_hidden = d_model * expansion_ratio

    key = jax.random.PRNGKey(0)
    kx, kwu, kbu, kwd, kbd = jax.random.split(key, 5)

    x = jax.random.normal(kx, (batch, seq, d_model), dtype=jnp.float32)
    # nn.Linear weights stored transposed as (in_features, out_features)
    w_up = jax.random.normal(kwu, (d_model, ffn_hidden), dtype=jnp.float32) * 0.05
    b_up = jax.random.normal(kbu, (ffn_hidden,), dtype=jnp.float32) * 0.01
    w_down = jax.random.normal(kwd, (ffn_hidden, d_model), dtype=jnp.float32) * 0.05
    b_down = jax.random.normal(kbd, (d_model,), dtype=jnp.float32) * 0.01

    out = mpt_mlp_forward(x, w_up, b_up, w_down, b_down)
    out = jax.block_until_ready(out)

    ref = _reference(x, w_up, b_up, w_down, b_down)
    assert out.shape == (batch, seq, d_model)
    assert jnp.allclose(out, ref, atol=2e-5, rtol=2e-5), "mismatch vs reference"

    print("KERNEL_OK")
</pallas_src>

<mosaic_0001>
module attributes {stable_mosaic.version = 11 : i64} {
  func.func @_mlp_kernel(%arg0: i32, %arg1: i32, %arg2: memref<16x32xf32, #tpu.memory_space<vmem>>, %arg3: memref<32x128xf32, #tpu.memory_space<vmem>>, %arg4: memref<1x128xf32, #tpu.memory_space<vmem>>, %arg5: memref<128x32xf32, #tpu.memory_space<vmem>>, %arg6: memref<1x32xf32, #tpu.memory_space<vmem>>, %arg7: memref<16x32xf32, #tpu.memory_space<vmem>>, %arg8: memref<16x32xf32, #tpu.memory_space<vmem>>) attributes {dimension_semantics = [#tpu.dimension_semantics<parallel>, #tpu.dimension_semantics<arbitrary>], iteration_bounds = array<i64: 1, 1>, scalar_prefetch = 0 : i64, scratch_operands = 1 : i64, tpu.core_type = #tpu.core_type<tc>, window_params = [{pipeline_mode = #tpu.pipeline_mode<synchronous>, transform_indices = @transform_0, window_bounds = array<i64: 16, 32>}, {transform_indices = @transform_1, window_bounds = array<i64: 32, 128>}, {transform_indices = @transform_2, window_bounds = array<i64: 1, 128>}, {transform_indices = @transform_3, window_bounds = array<i64: 128, 32>}, {pipeline_mode = #tpu.pipeline_mode<synchronous>, transform_indices = @transform_4, window_bounds = array<i64: 1, 32>}, {transform_indices = @transform_5, window_bounds = array<i64: 16, 32>}]} {
    %c0_i32 = arith.constant 0 : i32
    %0 = arith.cmpi eq, %arg1, %c0_i32 : i32
    %1 = arith.extui %0 : i1 to i32
    %c0_i32_0 = arith.constant 0 : i32
    %2 = arith.cmpi ne, %1, %c0_i32_0 : i32
    scf.if %2 {
      %cst_18 = arith.constant 0.000000e+00 : f32
      %25 = vector.broadcast %cst_18 : f32 to vector<16x32xf32>
      %c0_19 = arith.constant 0 : index
      %c0_20 = arith.constant 0 : index
      %26 = vector.load %arg8[%c0_19, %c0_20] : memref<16x32xf32, #tpu.memory_space<vmem>>, vector<16x32xf32>
      tpu.vector_store %arg8[%c0_19, %c0_20], %25 {strides = array<i32>} : memref<16x32xf32, #tpu.memory_space<vmem>>, vector<16x32xf32>,
    } else {
    }
    %c0 = arith.constant 0 : index
    %c0_1 = arith.constant 0 : index
    %3 = vector.load %arg2[%c0, %c0_1] : memref<16x32xf32, #tpu.memory_space<vmem>>, vector<16x32xf32>
    %c0_2 = arith.constant 0 : index
    %c0_3 = arith.constant 0 : index
    %4 = vector.load %arg3[%c0_2, %c0_3] : memref<32x128xf32, #tpu.memory_space<vmem>>, vector<32x128xf32>
    %cst = arith.constant dense<0.000000e+00> : vector<16x128xf32>
    %5 = tpu.matmul %3, %4, %cst {dimension_numbers = #tpu.dot_dimension_numbers<[1], [0], [0], [1], [0, 0, 1, 1], [], []>} : vector<16x32xf32>, vector<32x128xf32>, vector<16x128xf32> -> vector<16x128xf32>
    %c0_4 = arith.constant 0 : index
    %c0_5 = arith.constant 0 : index
    %6 = vector.load %arg4[%c0_4, %c0_5] : memref<1x128xf32, #tpu.memory_space<vmem>>, vector<1x128xf32>
    %7 = vector.broadcast %6 : vector<1x128xf32> to vector<16x128xf32>
    %8 = arith.addf %5, %7 : vector<16x128xf32>
    %cst_6 = arith.constant 5.000000e-01 : f32
    %9 = vector.broadcast %cst_6 : f32 to vector<16x128xf32>
    %10 = arith.mulf %9, %8 : vector<16x128xf32>
    %cst_7 = arith.constant 0.707106769 : f32
    %11 = vector.broadcast %cst_7 : f32 to vector<16x128xf32>
    %12 = arith.mulf %8, %11 : vector<16x128xf32>
    %13 = math.erf %12 : vector<16x128xf32>
    %cst_8 = arith.constant 1.000000e+00 : f32
    %14 = vector.broadcast %cst_8 : f32 to vector<16x128xf32>
    %15 = arith.addf %14, %13 : vector<16x128xf32>
    %16 = arith.mulf %10, %15 : vector<16x128xf32>
    %c0_9 = arith.constant 0 : index
    %c0_10 = arith.constant 0 : index
    %17 = vector.load %arg8[%c0_9, %c0_10] : memref<16x32xf32, #tpu.memory_space<vmem>>, vector<16x32xf32>
    %c0_11 = arith.constant 0 : index
    %c0_12 = arith.constant 0 : index
    %18 = vector.load %arg5[%c0_11, %c0_12] : memref<128x32xf32, #tpu.memory_space<vmem>>, vector<128x32xf32>
    %cst_13 = arith.constant dense<0.000000e+00> : vector<16x32xf32>
    %19 = tpu.matmul %16, %18, %cst_13 {dimension_numbers = #tpu.dot_dimension_numbers<[1], [0], [0], [1], [0, 0, 1, 1], [], []>} : vector<16x128xf32>, vector<128x32xf32>, vector<16x32xf32> -> vector<16x32xf32>
    %20 = arith.addf %17, %19 : vector<16x32xf32>
    %c0_14 = arith.constant 0 : index
    %c0_15 = arith.constant 0 : index
    %21 = vector.load %arg8[%c0_14, %c0_15] : memref<16x32xf32, #tpu.memory_space<vmem>>, vector<16x32xf32>
    tpu.vector_store %arg8[%c0_14, %c0_15], %20 {strides = array<i32>} : memref<16x32xf32, #tpu.memory_space<vmem>>, vector<16x32xf32>,
    %c0_i32_16 = arith.constant 0 : i32
    %22 = arith.cmpi eq, %arg1, %c0_i32_16 : i32
    %23 = arith.extui %22 : i1 to i32
    %c0_i32_17 = arith.constant 0 : i32
    %24 = arith.cmpi ne, %23, %c0_i32_17 : i32
    scf.if %24 {
      %c0_18 = arith.constant 0 : index
      %c0_19 = arith.constant 0 : index
      %25 = vector.load %arg8[%c0_18, %c0_19] : memref<16x32xf32, #tpu.memory_space<vmem>>, vector<16x32xf32>
      %c0_20 = arith.constant 0 : index
      %c0_21 = arith.constant 0 : index
      %26 = vector.load %arg6[%c0_20, %c0_21] : memref<1x32xf32, #tpu.memory_space<vmem>>, vector<1x32xf32>
      %27 = vector.broadcast %26 : vector<1x32xf32> to vector<16x32xf32>
      %28 = arith.addf %25, %27 : vector<16x32xf32>
      %c0_22 = arith.constant 0 : index
      %c0_23 = arith.constant 0 : index
      %29 = vector.load %arg7[%c0_22, %c0_23] : memref<16x32xf32, #tpu.memory_space<vmem>>, vector<16x32xf32>
      tpu.vector_store %arg7[%c0_22, %c0_23], %28 {strides = array<i32>} : memref<16x32xf32, #tpu.memory_space<vmem>>, vector<16x32xf32>,
    } else {
    }
    return
  }
  func.func @transform_0(%arg0: i32, %arg1: i32) -> (i32, i32) {
    %c0_i32 = arith.constant 0 : i32
    %c0_i32_0 = arith.constant 0 : i32
    return %arg0, %c0_i32 : i32, i32
  }
  func.func @transform_1(%arg0: i32, %arg1: i32) -> (i32, i32) {
    %c0_i32 = arith.constant 0 : i32
    %c0_i32_0 = arith.constant 0 : i32
    return %c0_i32, %arg1 : i32, i32
  }
  func.func @transform_2(%arg0: i32, %arg1: i32) -> (i32, i32) {
    %c0_i32 = arith.constant 0 : i32
    %c0_i32_0 = arith.constant 0 : i32
    return %c0_i32, %arg1 : i32, i32
  }
  func.func @transform_3(%arg0: i32, %arg1: i32) -> (i32, i32) {
    %c0_i32 = arith.constant 0 : i32
    %c0_i32_0 = arith.constant 0 : i32
    return %arg1, %c0_i32 : i32, i32
  }
  func.func @transform_4(%arg0: i32, %arg1: i32) -> (i32, i32) {
    %c0_i32 = arith.constant 0 : i32
    %c0_i32_0 = arith.constant 0 : i32
    %c0_i32_1 = arith.constant 0 : i32
    return %c0_i32, %c0_i32_0 : i32, i32
  }
  func.func @transform_5(%arg0: i32, %arg1: i32) -> (i32, i32) {
    %c0_i32 = arith.constant 0 : i32
    %c0_i32_0 = arith.constant 0 : i32
    return %arg0, %c0_i32 : i32, i32
  }
}

module attributes {stable_mosaic.version = 11 : i64} {
  func.func @_mlp_kernel(%arg0: i32, %arg1: i32, %arg2: memref<16x32xf32, #tpu.memory_space<vmem>>, %arg3: memref<32x128xf32, #tpu.memory_space<vmem>>, %arg4: memref<1x128xf32, #tpu.memory_space<vmem>>, %arg5: memref<128x32xf32, #tpu.memory_space<vmem>>, %arg6: memref<1x32xf32, #tpu.memory_space<vmem>>, %arg7: memref<16x32xf32, #tpu.memory_space<vmem>>, %arg8: memref<16x32xf32, #tpu.memory_space<vmem>>) attributes {dimension_semantics = [#tpu.dimension_semantics<parallel>, #tpu.dimension_semantics<arbitrary>], iteration_bounds = array<i64: 1, 1>, scalar_prefetch = 0 : i64, scratch_operands = 1 : i64, tpu.core_type = #tpu.core_type<tc>, window_params = [{transform_indices = @transform_0, window_bounds = array<i64: 16, 32>}, {transform_indices = @transform_1, window_bounds = array<i64: 32, 128>}, {transform_indices = @transform_2, window_bounds = array<i64: 1, 128>}, {transform_indices = @transform_3, window_bounds = array<i64: 128, 32>}, {pipeline_mode = #tpu.pipeline_mode<synchronous>, transform_indices = @transform_4, window_bounds = array<i64: 1, 32>}, {transform_indices = @transform_5, window_bounds = array<i64: 16, 32>}]} {
    %c0_i32 = arith.constant 0 : i32
    %0 = arith.cmpi eq, %arg1, %c0_i32 : i32
    %1 = arith.extui %0 : i1 to i32
    %c0_i32_0 = arith.constant 0 : i32
    %2 = arith.cmpi ne, %1, %c0_i32_0 : i32
    scf.if %2 {
      %cst_18 = arith.constant 0.000000e+00 : f32
      %25 = vector.broadcast %cst_18 : f32 to vector<16x32xf32>
      %c0_19 = arith.constant 0 : index
      %c0_20 = arith.constant 0 : index
      %26 = vector.load %arg8[%c0_19, %c0_20] : memref<16x32xf32, #tpu.memory_space<vmem>>, vector<16x32xf32>
      tpu.vector_store %arg8[%c0_19, %c0_20], %25 {strides = array<i32>} : memref<16x32xf32, #tpu.memory_space<vmem>>, vector<16x32xf32>,
    } else {
    }
    %c0 = arith.constant 0 : index
    %c0_1 = arith.constant 0 : index
    %3 = vector.load %arg2[%c0, %c0_1] : memref<16x32xf32, #tpu.memory_space<vmem>>, vector<16x32xf32>
    %c0_2 = arith.constant 0 : index
    %c0_3 = arith.constant 0 : index
    %4 = vector.load %arg3[%c0_2, %c0_3] : memref<32x128xf32, #tpu.memory_space<vmem>>, vector<32x128xf32>
    %cst = arith.constant dense<0.000000e+00> : vector<16x128xf32>
    %5 = tpu.matmul %3, %4, %cst {dimension_numbers = #tpu.dot_dimension_numbers<[1], [0], [0], [1], [0, 0, 1, 1], [], []>} : vector<16x32xf32>, vector<32x128xf32>, vector<16x128xf32> -> vector<16x128xf32>
    %c0_4 = arith.constant 0 : index
    %c0_5 = arith.constant 0 : index
    %6 = vector.load %arg4[%c0_4, %c0_5] : memref<1x128xf32, #tpu.memory_space<vmem>>, vector<1x128xf32>
    %7 = vector.broadcast %6 : vector<1x128xf32> to vector<16x128xf32>
    %8 = arith.addf %5, %7 : vector<16x128xf32>
    %cst_6 = arith.constant 5.000000e-01 : f32
    %9 = vector.broadcast %cst_6 : f32 to vector<16x128xf32>
    %10 = arith.mulf %9, %8 : vector<16x128xf32>
    %cst_7 = arith.constant 0.707106769 : f32
    %11 = vector.broadcast %cst_7 : f32 to vector<16x128xf32>
    %12 = arith.mulf %8, %11 : vector<16x128xf32>
    %13 = math.erf %12 : vector<16x128xf32>
    %cst_8 = arith.constant 1.000000e+00 : f32
    %14 = vector.broadcast %cst_8 : f32 to vector<16x128xf32>
    %15 = arith.addf %14, %13 : vector<16x128xf32>
    %16 = arith.mulf %10, %15 : vector<16x128xf32>
    %c0_9 = arith.constant 0 : index
    %c0_10 = arith.constant 0 : index
    %17 = vector.load %arg8[%c0_9, %c0_10] : memref<16x32xf32, #tpu.memory_space<vmem>>, vector<16x32xf32>
    %c0_11 = arith.constant 0 : index
    %c0_12 = arith.constant 0 : index
    %18 = vector.load %arg5[%c0_11, %c0_12] : memref<128x32xf32, #tpu.memory_space<vmem>>, vector<128x32xf32>
    %cst_13 = arith.constant dense<0.000000e+00> : vector<16x32xf32>
    %19 = tpu.matmul %16, %18, %cst_13 {dimension_numbers = #tpu.dot_dimension_numbers<[1], [0], [0], [1], [0, 0, 1, 1], [], []>} : vector<16x128xf32>, vector<128x32xf32>, vector<16x32xf32> -> vector<16x32xf32>
    %20 = arith.addf %17, %19 : vector<16x32xf32>
    %c0_14 = arith.constant 0 : index
    %c0_15 = arith.constant 0 : index
    %21 = vector.load %arg8[%c0_14, %c0_15] : memref<16x32xf32, #tpu.memory_space<vmem>>, vector<16x32xf32>
    tpu.vector_store %arg8[%c0_14, %c0_15], %20 {strides = array<i32>} : memref<16x32xf32, #tpu.memory_space<vmem>>, vector<16x32xf32>,
    %c0_i32_16 = arith.constant 0 : i32
    %22 = arith.cmpi eq, %arg1, %c0_i32_16 : i32
    %23 = arith.extui %22 : i1 to i32
    %c0_i32_17 = arith.constant 0 : i32
    %24 = arith.cmpi ne, %23, %c0_i32_17 : i32
    scf.if %24 {
      %c0_18 = arith.constant 0 : index
      %c0_19 = arith.constant 0 : index
      %25 = vector.load %arg8[%c0_18, %c0_19] : memref<16x32xf32, #tpu.memory_space<vmem>>, vector<16x32xf32>
      %c0_20 = arith.constant 0 : index
      %c0_21 = arith.constant 0 : index
      %26 = vector.load %arg6[%c0_20, %c0_21] : memref<1x32xf32, #tpu.memory_space<vmem>>, vector<1x32xf32>
      %27 = vector.broadcast %26 : vector<1x32xf32> to vector<16x32xf32>
      %28 = arith.addf %25, %27 : vector<16x32xf32>
      %c0_22 = arith.constant 0 : index
      %c0_23 = arith.constant 0 : index
      %29 = vector.load %arg7[%c0_22, %c0_23] : memref<16x32xf32, #tpu.memory_space<vmem>>, vector<16x32xf32>
      tpu.vector_store %arg7[%c0_22, %c0_23], %28 {strides = array<i32>} : memref<16x32xf32, #tpu.memory_space<vmem>>, vector<16x32xf32>,
    } else {
    }
    return
  }
  func.func @transform_0(%arg0: i32, %arg1: i32) -> (i32, i32) {
    %c0_i32 = arith.constant 0 : i32
    %c0_i32_0 = arith.constant 0 : i32
    return %arg0, %c0_i32 : i32, i32
  }
  func.func @transform_1(%arg0: i32, %arg1: i32) -> (i32, i32) {
    %c0_i32 = arith.constant 0 : i32
    %c0_i32_0 = arith.constant 0 : i32
    return %c0_i32, %arg1 : i32, i32
  }
  func.func @transform_2(%arg0: i32, %arg1: i32) -> (i32, i32) {
    %c0_i32 = arith.constant 0 : i32
    %c0_i32_0 = arith.constant 0 : i32
    return %c0_i32, %arg1 : i32, i32
  }
  func.func @transform_3(%arg0: i32, %arg1: i32) -> (i32, i32) {
    %c0_i32 = arith.constant 0 : i32
    %c0_i32_0 = arith.constant 0 : i32
    return %arg1, %c0_i32 : i32, i32
  }
  func.func @transform_4(%arg0: i32, %arg1: i32) -> (i32, i32) {
    %c0_i32 = arith.constant 0 : i32
    %c0_i32_0 = arith.constant 0 : i32
    %c0_i32_1 = arith.constant 0 : i32
    return %c0_i32, %c0_i32_0 : i32, i32
  }
  func.func @transform_5(%arg0: i32, %arg1: i32) -> (i32, i32) {
    %c0_i32 = arith.constant 0 : i32
    %c0_i32_0 = arith.constant 0 : i32
    return %arg0, %c0_i32 : i32, i32
  }
}

module attributes {stable_mosaic.version = 11 : i64} {
  func.func @_mlp_kernel(%arg0: i32, %arg1: i32, %arg2: memref<16x32xf32, #tpu.memory_space<vmem>>, %arg3: memref<32x128xf32, #tpu.memory_space<vmem>>, %arg4: memref<1x128xf32, #tpu.memory_space<vmem>>, %arg5: memref<128x32xf32, #tpu.memory_space<vmem>>, %arg6: memref<1x32xf32, #tpu.memory_space<vmem>>, %arg7: memref<16x32xf32, #tpu.memory_space<vmem>>, %arg8: memref<16x32xf32, #tpu.memory_space<vmem>>) attributes {dimension_semantics = [#tpu.dimension_semantics<parallel>, #tpu.dimension_semantics<arbitrary>], iteration_bounds = array<i64: 1, 1>, scalar_prefetch = 0 : i64, scratch_operands = 1 : i64, tpu.core_type = #tpu.core_type<tc>, window_params = [{transform_indices = @transform_0, window_bounds = array<i64: 16, 32>}, {transform_indices = @transform_1, window_bounds = array<i64: 32, 128>}, {transform_indices = @transform_2, window_bounds = array<i64: 1, 128>}, {transform_indices = @transform_3, window_bounds = array<i64: 128, 32>}, {pipeline_mode = #tpu.pipeline_mode<synchronous>, transform_indices = @transform_4, window_bounds = array<i64: 1, 32>}, {transform_indices = @transform_5, window_bounds = array<i64: 16, 32>}]} {
    %c0_i32 = arith.constant 0 : i32
    %0 = arith.cmpi eq, %arg1, %c0_i32 : i32
    %1 = arith.extui %0 : i1 to i32
    %c0_i32_0 = arith.constant 0 : i32
    %2 = arith.cmpi ne, %1, %c0_i32_0 : i32
    scf.if %2 {
      %cst_18 = arith.constant 0.000000e+00 : f32
      %25 = vector.broadcast %cst_18 : f32 to vector<16x32xf32>
      %c0_19 = arith.constant 0 : index
      %c0_20 = arith.constant 0 : index
      %26 = vector.load %arg8[%c0_19, %c0_20] : memref<16x32xf32, #tpu.memory_space<vmem>>, vector<16x32xf32>
      tpu.vector_store %arg8[%c0_19, %c0_20], %25 {strides = array<i32>} : memref<16x32xf32, #tpu.memory_space<vmem>>, vector<16x32xf32>,
    } else {
    }
    %c0 = arith.constant 0 : index
    %c0_1 = arith.constant 0 : index
    %3 = vector.load %arg2[%c0, %c0_1] : memref<16x32xf32, #tpu.memory_space<vmem>>, vector<16x32xf32>
    %c0_2 = arith.constant 0 : index
    %c0_3 = arith.constant 0 : index
    %4 = vector.load %arg3[%c0_2, %c0_3] : memref<32x128xf32, #tpu.memory_space<vmem>>, vector<32x128xf32>
    %cst = arith.constant dense<0.000000e+00> : vector<16x128xf32>
    %5 = tpu.matmul %3, %4, %cst {dimension_numbers = #tpu.dot_dimension_numbers<[1], [0], [0], [1], [0, 0, 1, 1], [], []>} : vector<16x32xf32>, vector<32x128xf32>, vector<16x128xf32> -> vector<16x128xf32>
    %c0_4 = arith.constant 0 : index
    %c0_5 = arith.constant 0 : index
    %6 = vector.load %arg4[%c0_4, %c0_5] : memref<1x128xf32, #tpu.memory_space<vmem>>, vector<1x128xf32>
    %7 = vector.broadcast %6 : vector<1x128xf32> to vector<16x128xf32>
    %8 = arith.addf %5, %7 : vector<16x128xf32>
    %cst_6 = arith.constant 5.000000e-01 : f32
    %9 = vector.broadcast %cst_6 : f32 to vector<16x128xf32>
    %10 = arith.mulf %9, %8 : vector<16x128xf32>
    %cst_7 = arith.constant 0.707106769 : f32
    %11 = vector.broadcast %cst_7 : f32 to vector<16x128xf32>
    %12 = arith.mulf %8, %11 : vector<16x128xf32>
    %13 = math.erf %12 : vector<16x128xf32>
    %cst_8 = arith.constant 1.000000e+00 : f32
    %14 = vector.broadcast %cst_8 : f32 to vector<16x128xf32>
    %15 = arith.addf %14, %13 : vector<16x128xf32>
    %16 = arith.mulf %10, %15 : vector<16x128xf32>
    %c0_9 = arith.constant 0 : index
    %c0_10 = arith.constant 0 : index
    %17 = vector.load %arg8[%c0_9, %c0_10] : memref<16x32xf32, #tpu.memory_space<vmem>>, vector<16x32xf32>
    %c0_11 = arith.constant 0 : index
    %c0_12 = arith.constant 0 : index
    %18 = vector.load %arg5[%c0_11, %c0_12] : memref<128x32xf32, #tpu.memory_space<vmem>>, vector<128x32xf32>
    %cst_13 = arith.constant dense<0.000000e+00> : vector<16x32xf32>
    %19 = tpu.matmul %16, %18, %cst_13 {dimension_numbers = #tpu.dot_dimension_numbers<[1], [0], [0], [1], [0, 0, 1, 1], [], []>} : vector<16x128xf32>, vector<128x32xf32>, vector<16x32xf32> -> vector<16x32xf32>
    %20 = arith.addf %17, %19 : vector<16x32xf32>
    %c0_14 = arith.constant 0 : index
    %c0_15 = arith.constant 0 : index
    %21 = vector.load %arg8[%c0_14, %c0_15] : memref<16x32xf32, #tpu.memory_space<vmem>>, vector<16x32xf32>
    tpu.vector_store %arg8[%c0_14, %c0_15], %20 {strides = array<i32>} : memref<16x32xf32, #tpu.memory_space<vmem>>, vector<16x32xf32>,
    %c0_i32_16 = arith.constant 0 : i32
    %22 = arith.cmpi eq, %arg1, %c0_i32_16 : i32
    %23 = arith.extui %22 : i1 to i32
    %c0_i32_17 = arith.constant 0 : i32
    %24 = arith.cmpi ne, %23, %c0_i32_17 : i32
    scf.if %24 {
      %c0_18 = arith.constant 0 : index
      %c0_19 = arith.constant 0 : index
      %25 = vector.load %arg8[%c0_18, %c0_19] : memref<16x32xf32, #tpu.memory_space<vmem>>, vector<16x32xf32>
      %c0_20 = arith.constant 0 : index
      %c0_21 = arith.constant 0 : index
      %26 = vector.load %arg6[%c0_20, %c0_21] : memref<1x32xf32, #tpu.memory_space<vmem>>, vector<1x32xf32>
      %27 = vector.broadcast %26 : vector<1x32xf32> to vector<16x32xf32>
      %28 = arith.addf %25, %27 : vector<16x32xf32>
      %c0_22 = arith.constant 0 : index
      %c0_23 = arith.constant 0 : index
      %29 = vector.load %arg7[%c0_22, %c0_23] : memref<16x32xf32, #tpu.memory_space<vmem>>, vector<16x32xf32>
      tpu.vector_store %arg7[%c0_22, %c0_23], %28 {strides = array<i32>} : memref<16x32xf32, #tpu.memory_space<vmem>>, vector<16x32xf32>,
    } else {
    }
    return
  }
  func.func @transform_0(%arg0: i32, %arg1: i32) -> (i32, i32) {
    %c0_i32 = arith.constant 0 : i32
    %c0_i32_0 = arith.constant 0 : i32
    return %arg0, %c0_i32 : i32, i32
  }
  func.func @transform_1(%arg0: i32, %arg1: i32) -> (i32, i32) {
    %c0_i32 = arith.constant 0 : i32
    %c0_i32_0 = arith.constant 0 : i32
    return %c0_i32, %arg1 : i32, i32
  }
  func.func @transform_2(%arg0: i32, %arg1: i32) -> (i32, i32) {
    %c0_i32 = arith.constant 0 : i32
    %c0_i32_0 = arith.constant 0 : i32
    return %c0_i32, %arg1 : i32, i32
  }
  func.func @transform_3(%arg0: i32, %arg1: i32) -> (i32, i32) {
    %c0_i32 = arith.constant 0 : i32
    %c0_i32_0 = arith.constant 0 : i32
    return %arg1, %c0_i32 : i32, i32
  }
  func.func @transform_4(%arg0: i32, %arg1: i32) -> (i32, i32) {
    %c0_i32 = arith.constant 0 : i32
    %c0_i32_0 = arith.constant 0 : i32
    %c0_i32_1 = arith.constant 0 : i32
    return %c0_i32, %c0_i32_0 : i32, i32
  }
  func.func @transform_5(%arg0: i32, %arg1: i32) -> (i32, i32) {
    %c0_i32 = arith.constant 0 : i32
    %c0_i32_0 = arith.constant 0 : i32
    return %arg0, %c0_i32 : i32, i32
  }
}

</mosaic_0001>

<llo_original>
// kernel: tpu_custom_call.1
$region0: #{tpu_custom_call.1}
  #allocation0 [shape = 'u32[]', space=smem, size = 0x4, offset = 0x4, fixed_abs, tag = 'smem constant byte address 0x4 - core index']
  #allocation1 [shape = 'u32[144,128]{1,0:T(1,128)}', space=vmem, size = 0x12000, scoped, tag = 'internal scratch']
  #allocation2 [shape = 'f32[16,32]{1,0:T(8,128)}', space=vmem, size = 0x2000, scoped, tag = 'scratch operand']
  %s0 = inlined_call_operand.vmem [shape: f32[16,32], index: 0, kind: input, shape index: {}]
  %s1 = inlined_call_operand.vmem [shape: f32[32,128], index: 1, kind: input, shape index: {}]
  %s2 = inlined_call_operand.vmem [shape: f32[1,128], index: 2, kind: input, shape index: {}]
  %s3 = inlined_call_operand.vmem [shape: f32[128,32], index: 3, kind: input, shape index: {}]
  %s4 = inlined_call_operand.vmem [shape: f32[1,32], index: 4, kind: input, shape index: {}]
  %s5 = inlined_call_operand.hbm [shape: f32[16,32], index: 5, kind: output, shape index: {}]
  %s6 = sld [smem:[#allocation0]]
  $region38: #{tpu_custom_call.1} parent=0
    _
  %s8 = ssub.s32 1, %s6
  %s9 = scalar_select 0, %s8, %s6
  $region1: #{tpu_custom_call.1} parent=0
    #allocation3 [shape = 'u8[8192]{0}', space=vmem, size = 0x2000, scoped, tag = 'output window, operand 0, single buffered']
    #allocation4 [shape = 's32[1]{0}', space=sflag, size = 0x4, scoped, tag = 'scoped memory for tpu_custom_call.1']
    %10 = vsyncpa [#allocation4], 0
    // Predicated region
    $region2: #{tpu_custom_call.1} parent=1 // pred_check
      _
    $region3: #{tpu_custom_call.1} parent=1 // pred_check_branch
      %12 = sbr.rel (0) target = $region5
    $region4: #{tpu_custom_call.1} parent=1 // pred_region
      _
    $region5: #{tpu_custom_call.1} parent=1 // pred_fallthru
      _
    // Predicated region
    $region6: #{tpu_custom_call.1} parent=1 // pred_check
      _
    $region7: #{tpu_custom_call.1} parent=1 // pred_check_branch
      %14 = sbr.rel (0) target = $region9
    $region8: #{tpu_custom_call.1} parent=1 // pred_region
      _
    $region9: #{tpu_custom_call.1} parent=1 // pred_fallthru
      _
    // Predicated region
    $region10: #{tpu_custom_call.1} parent=1 // pred_check
      _
    $region11: #{tpu_custom_call.1} parent=1 // pred_check_branch
      %16 = sbr.rel (0) target = $region13
    $region12: #{tpu_custom_call.1} parent=1 // pred_region
      _
    $region13: #{tpu_custom_call.1} parent=1 // pred_fallthru
      _
    // Predicated region
    $region14: #{tpu_custom_call.1} parent=1 // pred_check
      _
    $region15: #{tpu_custom_call.1} parent=1 // pred_check_branch
      %18 = sbr.rel (0) target = $region17
    $region16: #{tpu_custom_call.1} parent=1 // pred_region
      _
    $region17: #{tpu_custom_call.1} parent=1 // pred_fallthru
      _
    // Predicated region
    $region18: #{tpu_custom_call.1} parent=1 // pred_check
      _
    $region19: #{tpu_custom_call.1} parent=1 // pred_check_branch
      %20 = sbr.rel (0) target = $region21
    $region20: #{tpu_custom_call.1} parent=1 // pred_region
      _
    $region21: #{tpu_custom_call.1} parent=1 // pred_fallthru
      _
    %p21 = scmp.eq.s32.totalorder 0, 0
    // Predicated region
    $region22: #{tpu_custom_call.1} parent=1 // pred_check
      %p22 = pneg %p21
    $region23: #{tpu_custom_call.1} parent=1 // pred_check_branch
      %24 = sbr.rel (%p22) target = $region25
    $region24: #{tpu_custom_call.1} parent=1 // pred_region
      %vm25 = vcmask 261120
      %26 = vst.msk [vmem:[#allocation2] sm:$0xff] %vm25, 0.0
      %27 = vst.msk [vmem:[#allocation2 + $0x8] sm:$0xff] %vm25, 0.0
    $region25: #{tpu_custom_call.1} parent=1 // pred_fallthru
      _
    %v28 = vld [vmem:[%s0] sm:$0xff]
    %v29 = vld [vmem:[%s0 + $0x8] sm:$0xff]
    %v30 = vld [vmem:[%s1] sm:$0xff]
    %v31 = vld [vmem:[%s1 + $0x8] sm:$0xff]
    %v32 = vld [vmem:[%s1 + $0x10] sm:$0xff]
    %v33 = vld [vmem:[%s1 + $0x18] sm:$0xff]
    %v34 = vld [vmem:[%s2] sm:$0x1]
    %v36 = vlaneseq
    %v37 = vshrl.u32 %v36, 7
    %v38 = vsub.s32 0, %v37
    %v39 = vrot.slane %v34, %v38
    %vm41 = vcmask 261120
    %v43 = vsel %vm41, %v28, 0
    %v46 = vsel %vm41, %v29, 0
    %48 = vmatprep.subr.mxu0 0.0
    %49 = vmatpush1.msra.mxu0 %v30
    %50 = vmatprep.subr.mxu0 0.0
    %51 = vmatpush1.msra.mxu0 %v31
    %52 = vmatprep.subr.mxu0 0.0
    %53 = vmatpush1.msra.mxu0 %v32
    %54 = vmatprep.subr.mxu0 0.0
    %55 = vmatpush1.msra.mxu0 %v33
    %56 = vmatprep.subr.mxu0 0.0
    %57 = vmatpush1.msra.mxu0 0.0
    %58 = vmatprep.subr.mxu0 0.0
    %59 = vmatpush1.msra.mxu0 0.0
    %60 = vmatprep.subr.mxu0 0.0
    %61 = vmatpush1.msra.mxu0 0.0
    %62 = vmatprep.subr.mxu0 0.0
    %63 = vmatpush1.msra.mxu0 0.0
    %64 = vmatprep.subr.mxu0 0.0
    %65 = vmatpush1.msra.mxu0 0.0
    %66 = vmatprep.subr.mxu0 0.0
    %67 = vmatpush1.msra.mxu0 0.0
    %68 = vmatprep.subr.mxu0 0.0
    %69 = vmatpush1.msra.mxu0 0.0
    %70 = vmatprep.subr.mxu0 0.0
    %71 = vmatpush1.msra.mxu0 0.0
    %72 = vmatprep.subr.mxu0 0.0
    %73 = vmatpush1.msra.mxu0 0.0
    %74 = vmatprep.subr.mxu0 0.0
    %75 = vmatpush1.msra.mxu0 0.0
    %76 = vmatprep.subr.mxu0 0.0
    %77 = vmatpush1.msra.mxu0 0.0
    %78 = vmatprep.subr.mxu0 0.0
    %79 = vmatpush1.msra.mxu0 0.0
    %80 = vmatprep.subr.mxu0 0.0
    %81 = vmatpush1.msra.mxu0 0.0
    %82 = vmatprep.subr.mxu0 0.0
    %83 = vmatpush1.msra.mxu0 0.0
    %84 = vmatprep.subr.mxu0 0.0
    %85 = vmatpush1.msra.mxu0 0.0
    %86 = vmatprep.subr.mxu0 0.0
    %87 = vmatpush1.msra.mxu0 0.0
    %88 = vmatprep.subr.mxu0 0.0
    %89 = vmatpush1.msra.mxu0 0.0
    %90 = vmatprep.subr.mxu0 0.0
    %91 = vmatpush1.msra.mxu0 0.0
    %92 = vmatprep.subr.mxu0 0.0
    %93 = vmatpush1.msra.mxu0 0.0
    %94 = vmatprep.subr.mxu0 0.0
    %95 = vmatpush1.msra.mxu0 0.0
    %96 = vmatprep.subr.mxu0 0.0
    %97 = vmatpush1.msra.mxu0 0.0
    %98 = vmatprep.subr.mxu0 0.0
    %99 = vmatpush1.msra.mxu0 0.0
    %100 = vmatprep.subr.mxu0 0.0
    %101 = vmatpush1.msra.mxu0 0.0
    %102 = vmatprep.subr.mxu0 0.0
    %103 = vmatpush1.msra.mxu0 0.0
    %104 = vmatprep.subr.mxu0 0.0
    %105 = vmatpush1.msra.mxu0 0.0
    %106 = vmatprep.subr.mxu0 0.0
    %107 = vmatpush1.msra.mxu0 0.0
    %108 = vmatprep.subr.mxu0 0.0
    %109 = vmatpush1.msra.mxu0 0.0
    %110 = vmatprep.subr.mxu0 0.0
    %111 = vmatpush1.msra.mxu0 0.0
    %112 = vmatprep.mubr.f32.mxu0 0.0
    %113 = vmatmul.mubr.f32.gmra.mrb[0].mxu0 %v43
    %v114 = vpop.f32.mrb[0].mxu0
    %v115 = vadd.f32 %v39, %v114
    %v116 = vpop.f32.mrb[0].mxu0
    %117 = vmatprep.mubr.f32.mxu0 0.0
    %118 = vmatmul.mubr.f32.gmra.mrb[0].mxu0 %v46
    %v119 = vpop.f32.mrb[0].mxu0
    %v120 = vadd.f32 %v39, %v119
    %v121 = vpop.f32.mrb[0].mxu0
    %122 = vdwg.mxu0
    %v123 = vmul.f32 %v115, 0.5
    %v124 = vmul.f32 %v120, 0.5
    %v125 = vmul.f32 %v115, 0.70710677
    %v126 = vmul.f32 %v120, 0.70710677
    %v127 = verf.f32.pop %v125
    %v128 = verf.f32.pop %v126
    %v129 = vadd.f32 %v127, 1.0
    %v130 = vadd.f32 %v128, 1.0
    %v131 = vmul.f32 %v123, %v129
    %v132 = vmul.f32 %v124, %v130
    %v133 = vld [vmem:[#allocation2] sm:$0xff]
    %v134 = vld [vmem:[#allocation2 + $0x8] sm:$0xff]
    %v135 = vld [vmem:[%s3] sm:$0xff]
    %v136 = vld [vmem:[%s3 + $0x8] sm:$0xff]
    %v137 = vld [vmem:[%s3 + $0x10] sm:$0xff]
    %v138 = vld [vmem:[%s3 + $0x18] sm:$0xff]
    %v139 = vld [vmem:[%s3 + $0x20] sm:$0xff]
    %v140 = vld [vmem:[%s3 + $0x28] sm:$0xff]
    %v141 = vld [vmem:[%s3 + $0x30] sm:$0xff]
    %v142 = vld [vmem:[%s3 + $0x38] sm:$0xff]
    %v143 = vld [vmem:[%s3 + $0x40] sm:$0xff]
    %v144 = vld [vmem:[%s3 + $0x48] sm:$0xff]
    %v145 = vld [vmem:[%s3 + $0x50] sm:$0xff]
    %v146 = vld [vmem:[%s3 + $0x58] sm:$0xff]
    %v147 = vld [vmem:[%s3 + $0x60] sm:$0xff]
    %v148 = vld [vmem:[%s3 + $0x68] sm:$0xff]
    %v149 = vld [vmem:[%s3 + $0x70] sm:$0xff]
    %v150 = vld [vmem:[%s3 + $0x78] sm:$0xff]
    %151 = vmatprep.subr.mxu0 0.0
    %152 = vmatpush1.msra.mxu0 %v135
    %153 = vmatprep.subr.mxu0 0.0
    %154 = vmatpush1.msra.mxu0 %v136
    %155 = vmatprep.subr.mxu0 0.0
    %156 = vmatpush1.msra.mxu0 %v137
    %157 = vmatprep.subr.mxu0 0.0
    %158 = vmatpush1.msra.mxu0 %v138
    %159 = vmatprep.subr.mxu0 0.0
    %160 = vmatpush1.msra.mxu0 %v139
    %161 = vmatprep.subr.mxu0 0.0
    %162 = vmatpush1.msra.mxu0 %v140
    %163 = vmatprep.subr.mxu0 0.0
    %164 = vmatpush1.msra.mxu0 %v141
    %165 = vmatprep.subr.mxu0 0.0
    %166 = vmatpush1.msra.mxu0 %v142
    %167 = vmatprep.subr.mxu0 0.0
    %168 = vmatpush1.msra.mxu0 %v143
    %169 = vmatprep.subr.mxu0 0.0
    %170 = vmatpush1.msra.mxu0 %v144
    %171 = vmatprep.subr.mxu0 0.0
    %172 = vmatpush1.msra.mxu0 %v145
    %173 = vmatprep.subr.mxu0 0.0
    %174 = vmatpush1.msra.mxu0 %v146
    %175 = vmatprep.subr.mxu0 0.0
    %176 = vmatpush1.msra.mxu0 %v147
    %177 = vmatprep.subr.mxu0 0.0
    %178 = vmatpush1.msra.mxu0 %v148
    %179 = vmatprep.subr.mxu0 0.0
    %180 = vmatpush1.msra.mxu0 %v149
    %181 = vmatprep.subr.mxu0 0.0
    %182 = vmatpush1.msra.mxu0 %v150
    %183 = vmatprep.subr.mxu0 0.0
    %184 = vmatpush1.msra.mxu0 0.0
    %185 = vmatprep.subr.mxu0 0.0
    %186 = vmatpush1.msra.mxu0 0.0
    %187 = vmatprep.subr.mxu0 0.0
    %188 = vmatpush1.msra.mxu0 0.0
    %189 = vmatprep.subr.mxu0 0.0
    %190 = vmatpush1.msra.mxu0 0.0
    %191 = vmatprep.subr.mxu0 0.0
    %192 = vmatpush1.msra.mxu0 0.0
    %193 = vmatprep.subr.mxu0 0.0
    %194 = vmatpush1.msra.mxu0 0.0
    %195 = vmatprep.subr.mxu0 0.0
    %196 = vmatpush1.msra.mxu0 0.0
    %197 = vmatprep.subr.mxu0 0.0
    %198 = vmatpush1.msra.mxu0 0.0
    %199 = vmatprep.subr.mxu0 0.0
    %200 = vmatpush1.msra.mxu0 0.0
    %201 = vmatprep.subr.mxu0 0.0
    %202 = vmatpush1.msra.mxu0 0.0
    %203 = vmatprep.subr.mxu0 0.0
    %204 = vmatpush1.msra.mxu0 0.0
    %205 = vmatprep.subr.mxu0 0.0
    %206 = vmatpush1.msra.mxu0 0.0
    %207 = vmatprep.subr.mxu0 0.0
    %208 = vmatpush1.msra.mxu0 0.0
    %209 = vmatprep.subr.mxu0 0.0
    %210 = vmatpush1.msra.mxu0 0.0
    %211 = vmatprep.subr.mxu0 0.0
    %212 = vmatpush1.msra.mxu0 0.0
    %213 = vmatprep.subr.mxu0 0.0
    %214 = vmatpush1.msra.mxu0 0.0
    %215 = vmatprep.mubr.f32.mxu0 0.0
    %216 = vmatmul.mubr.f32.gmra.mrb[0].mxu0 %v131
    %v217 = vpop.f32.mrb[0].mxu0
    %v218 = vadd.f32 0.0, %v217
    %v219 = vpop.f32.mrb[0].mxu0
    %220 = vmatprep.mubr.f32.mxu0 0.0
    %221 = vmatmul.mubr.f32.gmra.mrb[0].mxu0 %v132
    %v222 = vpop.f32.mrb[0].mxu0
    %v223 = vadd.f32 0.0, %v222
    %v224 = vpop.f32.mrb[0].mxu0
    %225 = vdwg.mxu0
    %v226 = vadd.f32 %v133, %v218
    %v227 = vadd.f32 %v134, %v223
    %228 = vst.msk [vmem:[#allocation2] sm:$0xff] %vm41, %v226
    %229 = vst.msk [vmem:[#allocation2 + $0x8] sm:$0xff] %vm41, %v227
    // Predicated region
    $region26: #{tpu_custom_call.1} parent=1 // pred_check
      %p230 = pneg %p21
    $region27: #{tpu_custom_call.1} parent=1 // pred_check_branch
      %232 = sbr.rel (%p230) target = $region29
    $region28: #{tpu_custom_call.1} parent=1 // pred_region
      %v233 = vld [vmem:[#allocation2] sm:$0xff]
      %v234 = vld [vmem:[#allocation2 + $0x8] sm:$0xff]
      %v235 = vld [vmem:[%s4] sm:$0x1]
      %v237 = vlaneseq
      %v238 = vshrl.u32 %v237, 7
      %v239 = vsub.s32 0, %v238
      %v240 = vrot.slane %v235, %v239
      %v242 = vadd.f32 %v233, %v240
      %v243 = vadd.f32 %v234, %v240
      %244 = vst.msk [vmem:[#allocation3] sm:$0xff] %vm41, %v242
      %245 = vst.msk [vmem:[#allocation3 + $0x8] sm:$0xff] %vm41, %v243
    $region29: #{tpu_custom_call.1} parent=1 // pred_fallthru
      _
    // Predicated region
    $region30: #{tpu_custom_call.1} parent=1 // pred_check
      _
    $region31: #{tpu_custom_call.1} parent=1 // pred_check_branch
      %247 = sbr.rel (0) target = $region33
    $region32: #{tpu_custom_call.1} parent=1 // pred_region
      %s249 = ssub.s32 256, 256
      %250 = vsyncadd [#allocation4], %s249
      %s251 = sshll.u32 [#allocation3], 4
      %s252 = int_to_ptr.vmem [resolvable:$true] %s251
      %257 = dma.vmem_to_hbm [thread:$0]  %s252, 256, %s5, [#allocation4], 128, 128, 8
    $region33: #{tpu_custom_call.1} parent=1 // pred_fallthru
      _
    // Predicated region
    $region34: #{tpu_custom_call.1} parent=1 // pred_check
      _
    $region35: #{tpu_custom_call.1} parent=1 // pred_check_branch
      %259 = sbr.rel (0) target = $region37
    $region36: #{tpu_custom_call.1} parent=1 // pred_region
      %260 = dma.done [#allocation4], 256
    $region37: #{tpu_custom_call.1} parent=1 // pred_fallthru
      _
    %261 = vsyncpa [#allocation4], 1

// kernel: tpu_custom_call.1
$region0: #{tpu_custom_call.1}
  #allocation0 [shape = 'u32[]', space=smem, size = 0x4, offset = 0x4, fixed_abs, tag = 'smem constant byte address 0x4 - core index']
  #allocation1 [shape = 'u32[144,128]{1,0:T(1,128)}', space=vmem, size = 0x12000, scoped, tag = 'internal scratch']
  #allocation2 [shape = 'f32[16,32]{1,0:T(8,128)}', space=vmem, size = 0x2000, scoped, tag = 'scratch operand']
  %s0 = inlined_call_operand.vmem [shape: f32[16,32], index: 0, kind: input, shape index: {}]
  %s1 = inlined_call_operand.vmem [shape: f32[32,128], index: 1, kind: input, shape index: {}]
  %s2 = inlined_call_operand.vmem [shape: f32[1,128], index: 2, kind: input, shape index: {}]
  %s3 = inlined_call_operand.vmem [shape: f32[128,32], index: 3, kind: input, shape index: {}]
  %s4 = inlined_call_operand.vmem [shape: f32[1,32], index: 4, kind: input, shape index: {}]
  %s5 = inlined_call_operand.hbm [shape: f32[16,32], index: 5, kind: output, shape index: {}]
  %s6 = sld [smem:[#allocation0]]
  $region38: #{tpu_custom_call.1} parent=0
    _
  %s8 = ssub.s32 1, %s6
  %s9 = scalar_select 0, %s8, %s6
  $region1: #{tpu_custom_call.1} parent=0
    #allocation3 [shape = 'u8[8192]{0}', space=vmem, size = 0x2000, scoped, tag = 'output window, operand 0, single buffered']
    #allocation4 [shape = 's32[1]{0}', space=sflag, size = 0x4, scoped, tag = 'scoped memory for tpu_custom_call.1']
    %10 = vsyncpa [#allocation4], 0
    // Predicated region
    $region2: #{tpu_custom_call.1} parent=1 // pred_check
      _
    $region3: #{tpu_custom_call.1} parent=1 // pred_check_branch
      %12 = sbr.rel (0) target = $region5
    $region4: #{tpu_custom_call.1} parent=1 // pred_region
      _
    $region5: #{tpu_custom_call.1} parent=1 // pred_fallthru
      _
    // Predicated region
    $region6: #{tpu_custom_call.1} parent=1 // pred_check
      _
    $region7: #{tpu_custom_call.1} parent=1 // pred_check_branch
      %14 = sbr.rel (0) target = $region9
    $region8: #{tpu_custom_call.1} parent=1 // pred_region
      _
    $region9: #{tpu_custom_call.1} parent=1 // pred_fallthru
      _
    // Predicated region
    $region10: #{tpu_custom_call.1} parent=1 // pred_check
      _
    $region11: #{tpu_custom_call.1} parent=1 // pred_check_branch
      %16 = sbr.rel (0) target = $region13
    $region12: #{tpu_custom_call.1} parent=1 // pred_region
      _
    $region13: #{tpu_custom_call.1} parent=1 // pred_fallthru
      _
    // Predicated region
    $region14: #{tpu_custom_call.1} parent=1 // pred_check
      _
    $region15: #{tpu_custom_call.1} parent=1 // pred_check_branch
      %18 = sbr.rel (0) target = $region17
    $region16: #{tpu_custom_call.1} parent=1 // pred_region
      _
    $region17: #{tpu_custom_call.1} parent=1 // pred_fallthru
      _
    // Predicated region
    $region18: #{tpu_custom_call.1} parent=1 // pred_check
      _
    $region19: #{tpu_custom_call.1} parent=1 // pred_check_branch
      %20 = sbr.rel (0) target = $region21
    $region20: #{tpu_custom_call.1} parent=1 // pred_region
      _
    $region21: #{tpu_custom_call.1} parent=1 // pred_fallthru
      _
    %p21 = scmp.eq.s32.totalorder 0, 0
    // Predicated region
    $region22: #{tpu_custom_call.1} parent=1 // pred_check
      %p22 = pneg %p21
    $region23: #{tpu_custom_call.1} parent=1 // pred_check_branch
      %24 = sbr.rel (%p22) target = $region25
    $region24: #{tpu_custom_call.1} parent=1 // pred_region
      %vm25 = vcmask 261120
      %26 = vst.msk [vmem:[#allocation2] sm:$0xff] %vm25, 0.0
      %27 = vst.msk [vmem:[#allocation2 + $0x8] sm:$0xff] %vm25, 0.0
    $region25: #{tpu_custom_call.1} parent=1 // pred_fallthru
      _
    %v28 = vld [vmem:[%s0] sm:$0xff]
    %v29 = vld [vmem:[%s0 + $0x8] sm:$0xff]
    %v30 = vld [vmem:[%s1] sm:$0xff]
    %v31 = vld [vmem:[%s1 + $0x8] sm:$0xff]
    %v32 = vld [vmem:[%s1 + $0x10] sm:$0xff]
    %v33 = vld [vmem:[%s1 + $0x18] sm:$0xff]
    %v34 = vld [vmem:[%s2] sm:$0x1]
    %v36 = vlaneseq
    %v37 = vshrl.u32 %v36, 7
    %v38 = vsub.s32 0, %v37
    %v39 = vrot.slane %v34, %v38
    %vm41 = vcmask 261120
    %v43 = vsel %vm41, %v28, 0
    %v46 = vsel %vm41, %v29, 0
    %48 = vmatprep.subr.mxu0 0.0
    %49 = vmatpush1.msra.mxu0 %v30
    %50 = vmatprep.subr.mxu0 0.0
    %51 = vmatpush1.msra.mxu0 %v31
    %52 = vmatprep.subr.mxu0 0.0
    %53 = vmatpush1.msra.mxu0 %v32
    %54 = vmatprep.subr.mxu0 0.0
    %55 = vmatpush1.msra.mxu0 %v33
    %56 = vmatprep.subr.mxu0 0.0
    %57 = vmatpush1.msra.mxu0 0.0
    %58 = vmatprep.subr.mxu0 0.0
    %59 = vmatpush1.msra.mxu0 0.0
    %60 = vmatprep.subr.mxu0 0.0
    %61 = vmatpush1.msra.mxu0 0.0
    %62 = vmatprep.subr.mxu0 0.0
    %63 = vmatpush1.msra.mxu0 0.0
    %64 = vmatprep.subr.mxu0 0.0
    %65 = vmatpush1.msra.mxu0 0.0
    %66 = vmatprep.subr.mxu0 0.0
    %67 = vmatpush1.msra.mxu0 0.0
    %68 = vmatprep.subr.mxu0 0.0
    %69 = vmatpush1.msra.mxu0 0.0
    %70 = vmatprep.subr.mxu0 0.0
    %71 = vmatpush1.msra.mxu0 0.0
    %72 = vmatprep.subr.mxu0 0.0
    %73 = vmatpush1.msra.mxu0 0.0
    %74 = vmatprep.subr.mxu0 0.0
    %75 = vmatpush1.msra.mxu0 0.0
    %76 = vmatprep.subr.mxu0 0.0
    %77 = vmatpush1.msra.mxu0 0.0
    %78 = vmatprep.subr.mxu0 0.0
    %79 = vmatpush1.msra.mxu0 0.0
    %80 = vmatprep.subr.mxu0 0.0
    %81 = vmatpush1.msra.mxu0 0.0
    %82 = vmatprep.subr.mxu0 0.0
    %83 = vmatpush1.msra.mxu0 0.0
    %84 = vmatprep.subr.mxu0 0.0
    %85 = vmatpush1.msra.mxu0 0.0
    %86 = vmatprep.subr.mxu0 0.0
    %87 = vmatpush1.msra.mxu0 0.0
    %88 = vmatprep.subr.mxu0 0.0
    %89 = vmatpush1.msra.mxu0 0.0
    %90 = vmatprep.subr.mxu0 0.0
    %91 = vmatpush1.msra.mxu0 0.0
    %92 = vmatprep.subr.mxu0 0.0
    %93 = vmatpush1.msra.mxu0 0.0
    %94 = vmatprep.subr.mxu0 0.0
    %95 = vmatpush1.msra.mxu0 0.0
    %96 = vmatprep.subr.mxu0 0.0
    %97 = vmatpush1.msra.mxu0 0.0
    %98 = vmatprep.subr.mxu0 0.0
    %99 = vmatpush1.msra.mxu0 0.0
    %100 = vmatprep.subr.mxu0 0.0
    %101 = vmatpush1.msra.mxu0 0.0
    %102 = vmatprep.subr.mxu0 0.0
    %103 = vmatpush1.msra.mxu0 0.0
    %104 = vmatprep.subr.mxu0 0.0
    %105 = vmatpush1.msra.mxu0 0.0
    %106 = vmatprep.subr.mxu0 0.0
    %107 = vmatpush1.msra.mxu0 0.0
    %108 = vmatprep.subr.mxu0 0.0
    %109 = vmatpush1.msra.mxu0 0.0
    %110 = vmatprep.subr.mxu0 0.0
    %111 = vmatpush1.msra.mxu0 0.0
    %112 = vmatprep.mubr.f32.mxu0 0.0
    %113 = vmatmul.mubr.f32.gmra.mrb[0].mxu0 %v43
    %v114 = vpop.f32.mrb[0].mxu0
    %v115 = vadd.f32 %v39, %v114
    %v116 = vpop.f32.mrb[0].mxu0
    %117 = vmatprep.mubr.f32.mxu0 0.0
    %118 = vmatmul.mubr.f32.gmra.mrb[0].mxu0 %v46
    %v119 = vpop.f32.mrb[0].mxu0
    %v120 = vadd.f32 %v39, %v119
    %v121 = vpop.f32.mrb[0].mxu0
    %122 = vdwg.mxu0
    %v123 = vmul.f32 %v115, 0.5
    %v124 = vmul.f32 %v120, 0.5
    %v125 = vmul.f32 %v115, 0.70710677
    %v126 = vmul.f32 %v120, 0.70710677
    %v127 = verf.f32.pop %v125
    %v128 = verf.f32.pop %v126
    %v129 = vadd.f32 %v127, 1.0
    %v130 = vadd.f32 %v128, 1.0
    %v131 = vmul.f32 %v123, %v129
    %v132 = vmul.f32 %v124, %v130
    %v133 = vld [vmem:[#allocation2] sm:$0xff]
    %v134 = vld [vmem:[#allocation2 + $0x8] sm:$0xff]
    %v135 = vld [vmem:[%s3] sm:$0xff]
    %v136 = vld [vmem:[%s3 + $0x8] sm:$0xff]
    %v137 = vld [vmem:[%s3 + $0x10] sm:$0xff]
    %v138 = vld [vmem:[%s3 + $0x18] sm:$0xff]
    %v139 = vld [vmem:[%s3 + $0x20] sm:$0xff]
    %v140 = vld [vmem:[%s3 + $0x28] sm:$0xff]
    %v141 = vld [vmem:[%s3 + $0x30] sm:$0xff]
    %v142 = vld [vmem:[%s3 + $0x38] sm:$0xff]
    %v143 = vld [vmem:[%s3 + $0x40] sm:$0xff]
    %v144 = vld [vmem:[%s3 + $0x48] sm:$0xff]
    %v145 = vld [vmem:[%s3 + $0x50] sm:$0xff]
    %v146 = vld [vmem:[%s3 + $0x58] sm:$0xff]
    %v147 = vld [vmem:[%s3 + $0x60] sm:$0xff]
    %v148 = vld [vmem:[%s3 + $0x68] sm:$0xff]
    %v149 = vld [vmem:[%s3 + $0x70] sm:$0xff]
    %v150 = vld [vmem:[%s3 + $0x78] sm:$0xff]
    %151 = vmatprep.subr.mxu0 0.0
    %152 = vmatpush1.msra.mxu0 %v135
    %153 = vmatprep.subr.mxu0 0.0
    %154 = vmatpush1.msra.mxu0 %v136
    %155 = vmatprep.subr.mxu0 0.0
    %156 = vmatpush1.msra.mxu0 %v137
    %157 = vmatprep.subr.mxu0 0.0
    %158 = vmatpush1.msra.mxu0 %v138
    %159 = vmatprep.subr.mxu0 0.0
    %160 = vmatpush1.msra.mxu0 %v139
    %161 = vmatprep.subr.mxu0 0.0
    %162 = vmatpush1.msra.mxu0 %v140
    %163 = vmatprep.subr.mxu0 0.0
    %164 = vmatpush1.msra.mxu0 %v141
    %165 = vmatprep.subr.mxu0 0.0
    %166 = vmatpush1.msra.mxu0 %v142
    %167 = vmatprep.subr.mxu0 0.0
    %168 = vmatpush1.msra.mxu0 %v143
    %169 = vmatprep.subr.mxu0 0.0
    %170 = vmatpush1.msra.mxu0 %v144
    %171 = vmatprep.subr.mxu0 0.0
    %172 = vmatpush1.msra.mxu0 %v145
    %173 = vmatprep.subr.mxu0 0.0
    %174 = vmatpush1.msra.mxu0 %v146
    %175 = vmatprep.subr.mxu0 0.0
    %176 = vmatpush1.msra.mxu0 %v147
    %177 = vmatprep.subr.mxu0 0.0
    %178 = vmatpush1.msra.mxu0 %v148
    %179 = vmatprep.subr.mxu0 0.0
    %180 = vmatpush1.msra.mxu0 %v149
    %181 = vmatprep.subr.mxu0 0.0
    %182 = vmatpush1.msra.mxu0 %v150
    %183 = vmatprep.subr.mxu0 0.0
    %184 = vmatpush1.msra.mxu0 0.0
    %185 = vmatprep.subr.mxu0 0.0
    %186 = vmatpush1.msra.mxu0 0.0
    %187 = vmatprep.subr.mxu0 0.0
    %188 = vmatpush1.msra.mxu0 0.0
    %189 = vmatprep.subr.mxu0 0.0
    %190 = vmatpush1.msra.mxu0 0.0
    %191 = vmatprep.subr.mxu0 0.0
    %192 = vmatpush1.msra.mxu0 0.0
    %193 = vmatprep.subr.mxu0 0.0
    %194 = vmatpush1.msra.mxu0 0.0
    %195 = vmatprep.subr.mxu0 0.0
    %196 = vmatpush1.msra.mxu0 0.0
    %197 = vmatprep.subr.mxu0 0.0
    %198 = vmatpush1.msra.mxu0 0.0
    %199 = vmatprep.subr.mxu0 0.0
    %200 = vmatpush1.msra.mxu0 0.0
    %201 = vmatprep.subr.mxu0 0.0
    %202 = vmatpush1.msra.mxu0 0.0
    %203 = vmatprep.subr.mxu0 0.0
    %204 = vmatpush1.msra.mxu0 0.0
    %205 = vmatprep.subr.mxu0 0.0
    %206 = vmatpush1.msra.mxu0 0.0
    %207 = vmatprep.subr.mxu0 0.0
    %208 = vmatpush1.msra.mxu0 0.0
    %209 = vmatprep.subr.mxu0 0.0
    %210 = vmatpush1.msra.mxu0 0.0
    %211 = vmatprep.subr.mxu0 0.0
    %212 = vmatpush1.msra.mxu0 0.0
    %213 = vmatprep.subr.mxu0 0.0
    %214 = vmatpush1.msra.mxu0 0.0
    %215 = vmatprep.mubr.f32.mxu0 0.0
    %216 = vmatmul.mubr.f32.gmra.mrb[0].mxu0 %v131
    %v217 = vpop.f32.mrb[0].mxu0
    %v218 = vadd.f32 0.0, %v217
    %v219 = vpop.f32.mrb[0].mxu0
    %220 = vmatprep.mubr.f32.mxu0 0.0
    %221 = vmatmul.mubr.f32.gmra.mrb[0].mxu0 %v132
    %v222 = vpop.f32.mrb[0].mxu0
    %v223 = vadd.f32 0.0, %v222
    %v224 = vpop.f32.mrb[0].mxu0
    %225 = vdwg.mxu0
    %v226 = vadd.f32 %v133, %v218
    %v227 = vadd.f32 %v134, %v223
    %228 = vst.msk [vmem:[#allocation2] sm:$0xff] %vm41, %v226
    %229 = vst.msk [vmem:[#allocation2 + $0x8] sm:$0xff] %vm41, %v227
    // Predicated region
    $region26: #{tpu_custom_call.1} parent=1 // pred_check
      %p230 = pneg %p21
    $region27: #{tpu_custom_call.1} parent=1 // pred_check_branch
      %232 = sbr.rel (%p230) target = $region29
    $region28: #{tpu_custom_call.1} parent=1 // pred_region
      %v233 = vld [vmem:[#allocation2] sm:$0xff]
      %v234 = vld [vmem:[#allocation2 + $0x8] sm:$0xff]
      %v235 = vld [vmem:[%s4] sm:$0x1]
      %v237 = vlaneseq
      %v238 = vshrl.u32 %v237, 7
      %v239 = vsub.s32 0, %v238
      %v240 = vrot.slane %v235, %v239
      %v242 = vadd.f32 %v233, %v240
      %v243 = vadd.f32 %v234, %v240
      %244 = vst.msk [vmem:[#allocation3] sm:$0xff] %vm41, %v242
      %245 = vst.msk [vmem:[#allocation3 + $0x8] sm:$0xff] %vm41, %v243
    $region29: #{tpu_custom_call.1} parent=1 // pred_fallthru
      _
    // Predicated region
    $region30: #{tpu_custom_call.1} parent=1 // pred_check
      _
    $region31: #{tpu_custom_call.1} parent=1 // pred_check_branch
      %247 = sbr.rel (0) target = $region33
    $region32: #{tpu_custom_call.1} parent=1 // pred_region
      %s249 = ssub.s32 256, 256
      %250 = vsyncadd [#allocation4], %s249
      %s251 = sshll.u32 [#allocation3], 4
      %s252 = int_to_ptr.vmem [resolvable:$true] %s251
      %257 = dma.vmem_to_hbm [thread:$0]  %s252, 256, %s5, [#allocation4], 128, 128, 8
    $region33: #{tpu_custom_call.1} parent=1 // pred_fallthru
      _
    // Predicated region
    $region34: #{tpu_custom_call.1} parent=1 // pred_check
      _
    $region35: #{tpu_custom_call.1} parent=1 // pred_check_branch
      %259 = sbr.rel (0) target = $region37
    $region36: #{tpu_custom_call.1} parent=1 // pred_region
      %260 = dma.done [#allocation4], 256
    $region37: #{tpu_custom_call.1} parent=1 // pred_fallthru
      _
    %261 = vsyncpa [#allocation4], 1

// kernel: tpu_custom_call.1
$region0: #{tpu_custom_call.1}
  #allocation0 [shape = 'u32[]', space=smem, size = 0x4, offset = 0x4, fixed_abs, tag = 'smem constant byte address 0x4 - core index']
  #allocation1 [shape = 'u32[144,128]{1,0:T(1,128)}', space=vmem, size = 0x12000, scoped, tag = 'internal scratch']
  #allocation2 [shape = 'f32[16,32]{1,0:T(8,128)}', space=vmem, size = 0x2000, scoped, tag = 'scratch operand']
  %s0 = inlined_call_operand.vmem [shape: f32[16,32], index: 0, kind: input, shape index: {}]
  %s1 = inlined_call_operand.vmem [shape: f32[32,128], index: 1, kind: input, shape index: {}]
  %s2 = inlined_call_operand.vmem [shape: f32[1,128], index: 2, kind: input, shape index: {}]
  %s3 = inlined_call_operand.vmem [shape: f32[128,32], index: 3, kind: input, shape index: {}]
  %s4 = inlined_call_operand.vmem [shape: f32[1,32], index: 4, kind: input, shape index: {}]
  %s5 = inlined_call_operand.hbm [shape: f32[16,32], index: 5, kind: output, shape index: {}]
  %s6 = sld [smem:[#allocation0]]
  $region38: #{tpu_custom_call.1} parent=0
    _
  %s8 = ssub.s32 1, %s6
  %s9 = scalar_select 0, %s8, %s6
  $region1: #{tpu_custom_call.1} parent=0
    #allocation3 [shape = 'u8[8192]{0}', space=vmem, size = 0x2000, scoped, tag = 'output window, operand 0, single buffered']
    #allocation4 [shape = 's32[1]{0}', space=sflag, size = 0x4, scoped, tag = 'scoped memory for tpu_custom_call.1']
    %10 = vsyncpa [#allocation4], 0
    // Predicated region
    $region2: #{tpu_custom_call.1} parent=1 // pred_check
      _
    $region3: #{tpu_custom_call.1} parent=1 // pred_check_branch
      %12 = sbr.rel (0) target = $region5
    $region4: #{tpu_custom_call.1} parent=1 // pred_region
      _
    $region5: #{tpu_custom_call.1} parent=1 // pred_fallthru
      _
    // Predicated region
    $region6: #{tpu_custom_call.1} parent=1 // pred_check
      _
    $region7: #{tpu_custom_call.1} parent=1 // pred_check_branch
      %14 = sbr.rel (0) target = $region9
    $region8: #{tpu_custom_call.1} parent=1 // pred_region
      _
    $region9: #{tpu_custom_call.1} parent=1 // pred_fallthru
      _
    // Predicated region
    $region10: #{tpu_custom_call.1} parent=1 // pred_check
      _
    $region11: #{tpu_custom_call.1} parent=1 // pred_check_branch
      %16 = sbr.rel (0) target = $region13
    $region12: #{tpu_custom_call.1} parent=1 // pred_region
      _
    $region13: #{tpu_custom_call.1} parent=1 // pred_fallthru
      _
    // Predicated region
    $region14: #{tpu_custom_call.1} parent=1 // pred_check
      _
    $region15: #{tpu_custom_call.1} parent=1 // pred_check_branch
      %18 = sbr.rel (0) target = $region17
    $region16: #{tpu_custom_call.1} parent=1 // pred_region
      _
    $region17: #{tpu_custom_call.1} parent=1 // pred_fallthru
      _
    // Predicated region
    $region18: #{tpu_custom_call.1} parent=1 // pred_check
      _
    $region19: #{tpu_custom_call.1} parent=1 // pred_check_branch
      %20 = sbr.rel (0) target = $region21
    $region20: #{tpu_custom_call.1} parent=1 // pred_region
      _
    $region21: #{tpu_custom_call.1} parent=1 // pred_fallthru
      _
    %p21 = scmp.eq.s32.totalorder 0, 0
    // Predicated region
    $region22: #{tpu_custom_call.1} parent=1 // pred_check
      %p22 = pneg %p21
    $region23: #{tpu_custom_call.1} parent=1 // pred_check_branch
      %24 = sbr.rel (%p22) target = $region25
    $region24: #{tpu_custom_call.1} parent=1 // pred_region
      %vm25 = vcmask 261120
      %26 = vst.msk [vmem:[#allocation2] sm:$0xff] %vm25, 0.0
      %27 = vst.msk [vmem:[#allocation2 + $0x8] sm:$0xff] %vm25, 0.0
    $region25: #{tpu_custom_call.1} parent=1 // pred_fallthru
      _
    %v28 = vld [vmem:[%s0] sm:$0xff]
    %v29 = vld [vmem:[%s0 + $0x8] sm:$0xff]
    %v30 = vld [vmem:[%s1] sm:$0xff]
    %v31 = vld [vmem:[%s1 + $0x8] sm:$0xff]
    %v32 = vld [vmem:[%s1 + $0x10] sm:$0xff]
    %v33 = vld [vmem:[%s1 + $0x18] sm:$0xff]
    %v34 = vld [vmem:[%s2] sm:$0x1]
    %v36 = vlaneseq
    %v37 = vshrl.u32 %v36, 7
    %v38 = vsub.s32 0, %v37
    %v39 = vrot.slane %v34, %v38
    %vm41 = vcmask 261120
    %v43 = vsel %vm41, %v28, 0
    %v46 = vsel %vm41, %v29, 0
    %48 = vmatprep.subr.mxu0 0.0
    %49 = vmatpush1.msra.mxu0 %v30
    %50 = vmatprep.subr.mxu0 0.0
    %51 = vmatpush1.msra.mxu0 %v31
    %52 = vmatprep.subr.mxu0 0.0
    %53 = vmatpush1.msra.mxu0 %v32
    %54 = vmatprep.subr.mxu0 0.0
    %55 = vmatpush1.msra.mxu0 %v33
    %56 = vmatprep.subr.mxu0 0.0
    %57 = vmatpush1.msra.mxu0 0.0
    %58 = vmatprep.subr.mxu0 0.0
    %59 = vmatpush1.msra.mxu0 0.0
    %60 = vmatprep.subr.mxu0 0.0
    %61 = vmatpush1.msra.mxu0 0.0
    %62 = vmatprep.subr.mxu0 0.0
    %63 = vmatpush1.msra.mxu0 0.0
    %64 = vmatprep.subr.mxu0 0.0
    %65 = vmatpush1.msra.mxu0 0.0
    %66 = vmatprep.subr.mxu0 0.0
    %67 = vmatpush1.msra.mxu0 0.0
    %68 = vmatprep.subr.mxu0 0.0
    %69 = vmatpush1.msra.mxu0 0.0
    %70 = vmatprep.subr.mxu0 0.0
    %71 = vmatpush1.msra.mxu0 0.0
    %72 = vmatprep.subr.mxu0 0.0
    %73 = vmatpush1.msra.mxu0 0.0
    %74 = vmatprep.subr.mxu0 0.0
    %75 = vmatpush1.msra.mxu0 0.0
    %76 = vmatprep.subr.mxu0 0.0
    %77 = vmatpush1.msra.mxu0 0.0
    %78 = vmatprep.subr.mxu0 0.0
    %79 = vmatpush1.msra.mxu0 0.0
    %80 = vmatprep.subr.mxu0 0.0
    %81 = vmatpush1.msra.mxu0 0.0
    %82 = vmatprep.subr.mxu0 0.0
    %83 = vmatpush1.msra.mxu0 0.0
    %84 = vmatprep.subr.mxu0 0.0
    %85 = vmatpush1.msra.mxu0 0.0
    %86 = vmatprep.subr.mxu0 0.0
    %87 = vmatpush1.msra.mxu0 0.0
    %88 = vmatprep.subr.mxu0 0.0
    %89 = vmatpush1.msra.mxu0 0.0
    %90 = vmatprep.subr.mxu0 0.0
    %91 = vmatpush1.msra.mxu0 0.0
    %92 = vmatprep.subr.mxu0 0.0
    %93 = vmatpush1.msra.mxu0 0.0
    %94 = vmatprep.subr.mxu0 0.0
    %95 = vmatpush1.msra.mxu0 0.0
    %96 = vmatprep.subr.mxu0 0.0
    %97 = vmatpush1.msra.mxu0 0.0
    %98 = vmatprep.subr.mxu0 0.0
    %99 = vmatpush1.msra.mxu0 0.0
    %100 = vmatprep.subr.mxu0 0.0
    %101 = vmatpush1.msra.mxu0 0.0
    %102 = vmatprep.subr.mxu0 0.0
    %103 = vmatpush1.msra.mxu0 0.0
    %104 = vmatprep.subr.mxu0 0.0
    %105 = vmatpush1.msra.mxu0 0.0
    %106 = vmatprep.subr.mxu0 0.0
    %107 = vmatpush1.msra.mxu0 0.0
    %108 = vmatprep.subr.mxu0 0.0
    %109 = vmatpush1.msra.mxu0 0.0
    %110 = vmatprep.subr.mxu0 0.0
    %111 = vmatpush1.msra.mxu0 0.0
    %112 = vmatprep.mubr.f32.mxu0 0.0
    %113 = vmatmul.mubr.f32.gmra.mrb[0].mxu0 %v43
    %v114 = vpop.f32.mrb[0].mxu0
    %v115 = vadd.f32 %v39, %v114
    %v116 = vpop.f32.mrb[0].mxu0
    %117 = vmatprep.mubr.f32.mxu0 0.0
    %118 = vmatmul.mubr.f32.gmra.mrb[0].mxu0 %v46
    %v119 = vpop.f32.mrb[0].mxu0
    %v120 = vadd.f32 %v39, %v119
    %v121 = vpop.f32.mrb[0].mxu0
    %122 = vdwg.mxu0
    %v123 = vmul.f32 %v115, 0.5
    %v124 = vmul.f32 %v120, 0.5
    %v125 = vmul.f32 %v115, 0.70710677
    %v126 = vmul.f32 %v120, 0.70710677
    %v127 = verf.f32.pop %v125
    %v128 = verf.f32.pop %v126
    %v129 = vadd.f32 %v127, 1.0
    %v130 = vadd.f32 %v128, 1.0
    %v131 = vmul.f32 %v123, %v129
    %v132 = vmul.f32 %v124, %v130
    %v133 = vld [vmem:[#allocation2] sm:$0xff]
    %v134 = vld [vmem:[#allocation2 + $0x8] sm:$0xff]
    %v135 = vld [vmem:[%s3] sm:$0xff]
    %v136 = vld [vmem:[%s3 + $0x8] sm:$0xff]
    %v137 = vld [vmem:[%s3 + $0x10] sm:$0xff]
    %v138 = vld [vmem:[%s3 + $0x18] sm:$0xff]
    %v139 = vld [vmem:[%s3 + $0x20] sm:$0xff]
    %v140 = vld [vmem:[%s3 + $0x28] sm:$0xff]
    %v141 = vld [vmem:[%s3 + $0x30] sm:$0xff]
    %v142 = vld [vmem:[%s3 + $0x38] sm:$0xff]
    %v143 = vld [vmem:[%s3 + $0x40] sm:$0xff]
    %v144 = vld [vmem:[%s3 + $0x48] sm:$0xff]
    %v145 = vld [vmem:[%s3 + $0x50] sm:$0xff]
    %v146 = vld [vmem:[%s3 + $0x58] sm:$0xff]
    %v147 = vld [vmem:[%s3 + $0x60] sm:$0xff]
    %v148 = vld [vmem:[%s3 + $0x68] sm:$0xff]
    %v149 = vld [vmem:[%s3 + $0x70] sm:$0xff]
    %v150 = vld [vmem:[%s3 + $0x78] sm:$0xff]
    %151 = vmatprep.subr.mxu0 0.0
    %152 = vmatpush1.msra.mxu0 %v135
    %153 = vmatprep.subr.mxu0 0.0
    %154 = vmatpush1.msra.mxu0 %v136
    %155 = vmatprep.subr.mxu0 0.0
    %156 = vmatpush1.msra.mxu0 %v137
    %157 = vmatprep.subr.mxu0 0.0
    %158 = vmatpush1.msra.mxu0 %v138
    %159 = vmatprep.subr.mxu0 0.0
    %160 = vmatpush1.msra.mxu0 %v139
    %161 = vmatprep.subr.mxu0 0.0
    %162 = vmatpush1.msra.mxu0 %v140
    %163 = vmatprep.subr.mxu0 0.0
    %164 = vmatpush1.msra.mxu0 %v141
    %165 = vmatprep.subr.mxu0 0.0
    %166 = vmatpush1.msra.mxu0 %v142
    %167 = vmatprep.subr.mxu0 0.0
    %168 = vmatpush1.msra.mxu0 %v143
    %169 = vmatprep.subr.mxu0 0.0
    %170 = vmatpush1.msra.mxu0 %v144
    %171 = vmatprep.subr.mxu0 0.0
    %172 = vmatpush1.msra.mxu0 %v145
    %173 = vmatprep.subr.mxu0 0.0
    %174 = vmatpush1.msra.mxu0 %v146
    %175 = vmatprep.subr.mxu0 0.0
    %176 = vmatpush1.msra.mxu0 %v147
    %177 = vmatprep.subr.mxu0 0.0
    %178 = vmatpush1.msra.mxu0 %v148
    %179 = vmatprep.subr.mxu0 0.0
    %180 = vmatpush1.msra.mxu0 %v149
    %181 = vmatprep.subr.mxu0 0.0
    %182 = vmatpush1.msra.mxu0 %v150
    %183 = vmatprep.subr.mxu0 0.0
    %184 = vmatpush1.msra.mxu0 0.0
    %185 = vmatprep.subr.mxu0 0.0
    %186 = vmatpush1.msra.mxu0 0.0
    %187 = vmatprep.subr.mxu0 0.0
    %188 = vmatpush1.msra.mxu0 0.0
    %189 = vmatprep.subr.mxu0 0.0
    %190 = vmatpush1.msra.mxu0 0.0
    %191 = vmatprep.subr.mxu0 0.0
    %192 = vmatpush1.msra.mxu0 0.0
    %193 = vmatprep.subr.mxu0 0.0
    %194 = vmatpush1.msra.mxu0 0.0
    %195 = vmatprep.subr.mxu0 0.0
    %196 = vmatpush1.msra.mxu0 0.0
    %197 = vmatprep.subr.mxu0 0.0
    %198 = vmatpush1.msra.mxu0 0.0
    %199 = vmatprep.subr.mxu0 0.0
    %200 = vmatpush1.msra.mxu0 0.0
    %201 = vmatprep.subr.mxu0 0.0
    %202 = vmatpush1.msra.mxu0 0.0
    %203 = vmatprep.subr.mxu0 0.0
    %204 = vmatpush1.msra.mxu0 0.0
    %205 = vmatprep.subr.mxu0 0.0
    %206 = vmatpush1.msra.mxu0 0.0
    %207 = vmatprep.subr.mxu0 0.0
    %208 = vmatpush1.msra.mxu0 0.0
    %209 = vmatprep.subr.mxu0 0.0
    %210 = vmatpush1.msra.mxu0 0.0
    %211 = vmatprep.subr.mxu0 0.0
    %212 = vmatpush1.msra.mxu0 0.0
    %213 = vmatprep.subr.mxu0 0.0
    %214 = vmatpush1.msra.mxu0 0.0
    %215 = vmatprep.mubr.f32.mxu0 0.0
    %216 = vmatmul.mubr.f32.gmra.mrb[0].mxu0 %v131
    %v217 = vpop.f32.mrb[0].mxu0
    %v218 = vadd.f32 0.0, %v217
    %v219 = vpop.f32.mrb[0].mxu0
    %220 = vmatprep.mubr.f32.mxu0 0.0
    %221 = vmatmul.mubr.f32.gmra.mrb[0].mxu0 %v132
    %v222 = vpop.f32.mrb[0].mxu0
    %v223 = vadd.f32 0.0, %v222
    %v224 = vpop.f32.mrb[0].mxu0
    %225 = vdwg.mxu0
    %v226 = vadd.f32 %v133, %v218
    %v227 = vadd.f32 %v134, %v223
    %228 = vst.msk [vmem:[#allocation2] sm:$0xff] %vm41, %v226
    %229 = vst.msk [vmem:[#allocation2 + $0x8] sm:$0xff] %vm41, %v227
    // Predicated region
    $region26: #{tpu_custom_call.1} parent=1 // pred_check
      %p230 = pneg %p21
    $region27: #{tpu_custom_call.1} parent=1 // pred_check_branch
      %232 = sbr.rel (%p230) target = $region29
    $region28: #{tpu_custom_call.1} parent=1 // pred_region
      %v233 = vld [vmem:[#allocation2] sm:$0xff]
      %v234 = vld [vmem:[#allocation2 + $0x8] sm:$0xff]
      %v235 = vld [vmem:[%s4] sm:$0x1]
      %v237 = vlaneseq
      %v238 = vshrl.u32 %v237, 7
      %v239 = vsub.s32 0, %v238
      %v240 = vrot.slane %v235, %v239
      %v242 = vadd.f32 %v233, %v240
      %v243 = vadd.f32 %v234, %v240
      %244 = vst.msk [vmem:[#allocation3] sm:$0xff] %vm41, %v242
      %245 = vst.msk [vmem:[#allocation3 + $0x8] sm:$0xff] %vm41, %v243
    $region29: #{tpu_custom_call.1} parent=1 // pred_fallthru
      _
    // Predicated region
    $region30: #{tpu_custom_call.1} parent=1 // pred_check
      _
    $region31: #{tpu_custom_call.1} parent=1 // pred_check_branch
      %247 = sbr.rel (0) target = $region33
    $region32: #{tpu_custom_call.1} parent=1 // pred_region
      %s249 = ssub.s32 256, 256
      %250 = vsyncadd [#allocation4], %s249
      %s251 = sshll.u32 [#allocation3], 4
      %s252 = int_to_ptr.vmem [resolvable:$true] %s251
      %257 = dma.vmem_to_hbm [thread:$0]  %s252, 256, %s5, [#allocation4], 128, 128, 8
    $region33: #{tpu_custom_call.1} parent=1 // pred_fallthru
      _
    // Predicated region
    $region34: #{tpu_custom_call.1} parent=1 // pred_check
      _
    $region35: #{tpu_custom_call.1} parent=1 // pred_check_branch
      %259 = sbr.rel (0) target = $region37
    $region36: #{tpu_custom_call.1} parent=1 // pred_region
      %260 = dma.done [#allocation4], 256
    $region37: #{tpu_custom_call.1} parent=1 // pred_fallthru
      _
    %261 = vsyncpa [#allocation4], 1

</llo_original>
